<compile_context>
chip_gen: v7x
topology: tpu7x:2x2x1
jax: 0.10.0
libtpu: 0.0.40
codegen_flags: <defaults>
</compile_context>

<pallas_src>
import functools

import jax
import jax.numpy as jnp
from jax.experimental import pallas as pl
from jax.experimental.pallas import tpu as pltpu


def _round_up(x, m):
    return ((x + m - 1) // m) * m


def _vmem_capacity_bytes():
    # Generation-aware budget; fall back to the smallest (v7x per-TC) value.
    try:
        return int(pltpu.get_tpu_info().vmem_capacity_bytes)
    except Exception:  # pragma: no cover - conservative fallback
        return 64 * 1024 * 1024


def _logits_d_kernel(x_ref, w1_ref, b1_ref, w2_ref, out_ref):
    # x_ref  : (tm, H)    logits row tile
    # w1_ref : (H, H)     W1^T pre-scaled by 1/temperature (f32, resident)
    # b1_ref : (1, H)     lin bias (f32, resident)
    # w2_ref : (H, C+1)   W2^T (f32, resident)
    # out_ref: (tm, C+1)
    x = x_ref[...].astype(jnp.float32)
    h = jnp.dot(x, w1_ref[...], preferred_element_type=jnp.float32)   # MXU
    h = x + (h + b1_ref[...])            # residual: logits + lin(logits / T)
    h = jnp.maximum(h, 0.0)              # ReLU (VPU)
    out = jnp.dot(h, w2_ref[...], preferred_element_type=jnp.float32)  # MXU
    out_ref[...] = out.astype(out_ref.dtype)


@functools.partial(jax.jit, static_argnames=("temperature", "tm"))
def logits_d_forward(logits, w1, b1, w2, *, temperature=1.0, tm=None):
    """logits: (N, H); w1: (H, H); b1: (H,); w2: (C+1, H) -> (N, C+1)."""
    N, H = logits.shape
    C1, H2 = w2.shape
    assert H2 == H and w1.shape == (H, H) and b1.shape == (H,)

    # Fold temperature into W1^T (exact: (x/T) @ W^T == x @ (W^T / T)).
    inv_t = jnp.float32(1.0 / float(temperature))
    w1t = w1.astype(jnp.float32).T * inv_t            # (H, H)
    b1r = b1.astype(jnp.float32).reshape(1, H)        # (1, H)
    w2t = w2.astype(jnp.float32).T                    # (H, C+1)

    # ---- tile sizing (generation-aware) ------------------------------------
    in_isize = jnp.dtype(logits.dtype).itemsize
    out_isize = in_isize                               # output follows input dtype
    row_align = {1: 32, 2: 16}.get(in_isize, 8)        # sublane tiling per dtype
    Hp = _round_up(H, 128)                             # lane-padded accounting
    Cp = _round_up(C1, 128)

    vmem_cap = _vmem_capacity_bytes()
    # Constant-index weight operands are single-buffered (pl.Buffered(1)).
    weight_bytes = (Hp * Hp + Hp + Hp * Cp) * 4
    stream_budget = max(2 * 1024 * 1024, int(vmem_cap * 0.55) - weight_bytes)
    per_row = 2 * (Hp * in_isize + Cp * out_isize)     # double-buffered in + out
    tm_cap = max(row_align, (stream_budget // per_row) // row_align * row_align)
    # Floor: each streamed input tile should be >= ~2 MiB to amortize the
    # ~600-cycle per-grid-step pipeline overhead (matters when H is small).
    tm_floor = _round_up(
        max(row_align, (2 * 1024 * 1024) // max(1, Hp * in_isize)), row_align)

    if tm is None:
        tm = tm_cap
    tm = min(int(tm), tm_cap)
    # Keep >= 2 grid steps (megacore sharding on v7x) unless that would shrink
    # tiles below the streaming floor.
    half = _round_up(pl.cdiv(N, 2), row_align)
    if half >= tm_floor:
        tm = min(tm, half)
    tm = _round_up(max(row_align, min(tm, _round_up(N, row_align))), row_align)

    # Ragged last block: rows are independent (no cross-row reduction), and
    # out-of-bounds rows of the final tile are simply dropped on store.
    grid = (pl.cdiv(N, tm),)

    stream_bytes = 2 * tm * (Hp * in_isize + Cp * out_isize)
    vmem_limit = int(min(max((weight_bytes + stream_bytes) * 5 // 4,
                             32 * 1024 * 1024),
                         max(32 * 1024 * 1024, int(vmem_cap * 0.7))))

    resident = pl.Buffered(1)   # constant index_map -> second buffer is waste
    out = pl.pallas_call(
        _logits_d_kernel,
        out_shape=jax.ShapeDtypeStruct((N, C1), logits.dtype),
        grid_spec=pltpu.PrefetchScalarGridSpec(
            num_scalar_prefetch=0,
            grid=grid,
            in_specs=[
                pl.BlockSpec((tm, H), lambda i: (i, 0)),     # logits row tile
                pl.BlockSpec((H, H), lambda i: (0, 0),
                             pipeline_mode=resident),        # W1^T / T
                pl.BlockSpec((1, H), lambda i: (0, 0),
                             pipeline_mode=resident),        # b1
                pl.BlockSpec((H, C1), lambda i: (0, 0),
                             pipeline_mode=resident),        # W2^T
            ],
            out_specs=pl.BlockSpec((tm, C1), lambda i: (i, 0)),
        ),
        compiler_params=pltpu.CompilerParams(
            dimension_semantics=("parallel",),
            vmem_limit_bytes=vmem_limit,
        ),
    )(logits, w1t, b1r, w2t)
    return out


if __name__ == "__main__":
    key = jax.random.PRNGKey(0)
    n_class, n_hidden = 4, 32

    def ref_forward(logits, w1, b1, w2, temperature):
        h = (logits / temperature) @ w1.T + b1
        h = jnp.maximum(logits + h, 0.0)
        return h @ w2.T

    k1, k2, k3, k4 = jax.random.split(key, 4)
    w1 = jax.random.normal(k2, (n_hidden, n_hidden), dtype=jnp.float32) * 0.1
    b1 = jax.random.normal(k3, (n_hidden,), dtype=jnp.float32) * 0.1
    w2 = jax.random.normal(k4, (n_class + 1, n_hidden), dtype=jnp.float32) * 0.1

    # Case 1: small node count, single grid step, auto tile sizing.
    n_nodes = 16
    logits = jax.random.normal(k1, (n_nodes, n_hidden), dtype=jnp.float32)
    for temperature in (1.0, 2.0):
        out = jax.block_until_ready(
            logits_d_forward(logits, w1, b1, w2, temperature=temperature))
        ref = ref_forward(logits, w1, b1, w2, temperature)
        assert out.shape == (n_nodes, n_class + 1)
        assert jnp.allclose(out, ref, atol=1e-5, rtol=1e-5)

    # Case 2: exercise the ragged last block + multi-step grid (cdiv path).
    n_nodes2 = 300
    logits2 = jax.random.normal(k1, (n_nodes2, n_hidden), dtype=jnp.float32)
    out2 = jax.block_until_ready(
        logits_d_forward(logits2, w1, b1, w2, temperature=1.5, tm=128))
    ref2 = ref_forward(logits2, w1, b1, w2, 1.5)
    assert out2.shape == (n_nodes2, n_class + 1)
    assert jnp.allclose(out2, ref2, atol=1e-5, rtol=1e-5)

    print("KERNEL_OK")
</pallas_src>

<mosaic_0001>
module attributes {stable_mosaic.version = 11 : i64} {
  func.func @_logits_d_kernel(%arg0: i32, %arg1: memref<16x32xf32, #tpu.memory_space<vmem>>, %arg2: memref<32x32xf32, #tpu.memory_space<vmem>>, %arg3: memref<1x32xf32, #tpu.memory_space<vmem>>, %arg4: memref<32x5xf32, #tpu.memory_space<vmem>>, %arg5: memref<16x5xf32, #tpu.memory_space<vmem>>) attributes {dimension_semantics = [#tpu.dimension_semantics<parallel>], iteration_bounds = array<i64: 1>, scalar_prefetch = 0 : i64, scratch_operands = 0 : i64, tpu.core_type = #tpu.core_type<tc>, window_params = [{transform_indices = @transform_0, window_bounds = array<i64: 16, 32>}, {pipeline_mode = #tpu.pipeline_mode<synchronous>, transform_indices = @transform_1, window_bounds = array<i64: 32, 32>}, {pipeline_mode = #tpu.pipeline_mode<synchronous>, transform_indices = @transform_2, window_bounds = array<i64: 1, 32>}, {pipeline_mode = #tpu.pipeline_mode<synchronous>, transform_indices = @transform_3, window_bounds = array<i64: 32, 5>}, {transform_indices = @transform_4, window_bounds = array<i64: 16, 5>}]} {
    %c0 = arith.constant 0 : index
    %c0_0 = arith.constant 0 : index
    %0 = vector.load %arg1[%c0, %c0_0] : memref<16x32xf32, #tpu.memory_space<vmem>>, vector<16x32xf32>
    %c0_1 = arith.constant 0 : index
    %c0_2 = arith.constant 0 : index
    %1 = vector.load %arg2[%c0_1, %c0_2] : memref<32x32xf32, #tpu.memory_space<vmem>>, vector<32x32xf32>
    %cst = arith.constant dense<0.000000e+00> : vector<16x32xf32>
    %2 = tpu.matmul %0, %1, %cst {dimension_numbers = #tpu.dot_dimension_numbers<[1], [0], [0], [1], [0, 0, 1, 1], [], []>} : vector<16x32xf32>, vector<32x32xf32>, vector<16x32xf32> -> vector<16x32xf32>
    %c0_3 = arith.constant 0 : index
    %c0_4 = arith.constant 0 : index
    %3 = vector.load %arg3[%c0_3, %c0_4] : memref<1x32xf32, #tpu.memory_space<vmem>>, vector<1x32xf32>
    %4 = vector.broadcast %3 : vector<1x32xf32> to vector<16x32xf32>
    %5 = arith.addf %2, %4 : vector<16x32xf32>
    %6 = arith.addf %0, %5 : vector<16x32xf32>
    %cst_5 = arith.constant 0.000000e+00 : f32
    %7 = vector.broadcast %cst_5 : f32 to vector<16x32xf32>
    %8 = arith.maximumf %6, %7 : vector<16x32xf32>
    %c0_6 = arith.constant 0 : index
    %c0_7 = arith.constant 0 : index
    %9 = vector.load %arg4[%c0_6, %c0_7] : memref<32x5xf32, #tpu.memory_space<vmem>>, vector<32x5xf32>
    %cst_8 = arith.constant dense<0.000000e+00> : vector<16x5xf32>
    %10 = tpu.matmul %8, %9, %cst_8 {dimension_numbers = #tpu.dot_dimension_numbers<[1], [0], [0], [1], [0, 0, 1, 1], [], []>} : vector<16x32xf32>, vector<32x5xf32>, vector<16x5xf32> -> vector<16x5xf32>
    %c0_9 = arith.constant 0 : index
    %c0_10 = arith.constant 0 : index
    %11 = vector.load %arg5[%c0_9, %c0_10] : memref<16x5xf32, #tpu.memory_space<vmem>>, vector<16x5xf32>
    tpu.vector_store %arg5[%c0_9, %c0_10], %10 {strides = array<i32>} : memref<16x5xf32, #tpu.memory_space<vmem>>, vector<16x5xf32>,
    return
  }
  func.func @transform_0(%arg0: i32) -> (i32, i32) {
    %c0_i32 = arith.constant 0 : i32
    %c0_i32_0 = arith.constant 0 : i32
    return %arg0, %c0_i32 : i32, i32
  }
  func.func @transform_1(%arg0: i32) -> (i32, i32) {
    %c0_i32 = arith.constant 0 : i32
    %c0_i32_0 = arith.constant 0 : i32
    %c0_i32_1 = arith.constant 0 : i32
    return %c0_i32, %c0_i32_0 : i32, i32
  }
  func.func @transform_2(%arg0: i32) -> (i32, i32) {
    %c0_i32 = arith.constant 0 : i32
    %c0_i32_0 = arith.constant 0 : i32
    %c0_i32_1 = arith.constant 0 : i32
    return %c0_i32, %c0_i32_0 : i32, i32
  }
  func.func @transform_3(%arg0: i32) -> (i32, i32) {
    %c0_i32 = arith.constant 0 : i32
    %c0_i32_0 = arith.constant 0 : i32
    %c0_i32_1 = arith.constant 0 : i32
    return %c0_i32, %c0_i32_0 : i32, i32
  }
  func.func @transform_4(%arg0: i32) -> (i32, i32) {
    %c0_i32 = arith.constant 0 : i32
    %c0_i32_0 = arith.constant 0 : i32
    return %arg0, %c0_i32 : i32, i32
  }
}

</mosaic_0001>

<llo_original>
// kernel: logits_d_forward.1
$region0: #{logits_d_forward.1}
  #allocation0 [shape = 'u32[]', space=smem, size = 0x4, offset = 0x4, fixed_abs, tag = 'smem constant byte address 0x4 - core index']
  #allocation1 [shape = 'u32[144,128]{1,0:T(1,128)}', space=vmem, size = 0x12000, scoped, tag = 'internal scratch']
  %s0 = inlined_call_operand.vmem [shape: f32[16,32], index: 0, kind: input, shape index: {}]
  %s1 = inlined_call_operand.vmem [shape: f32[32,32], index: 1, kind: input, shape index: {}]
  %s2 = inlined_call_operand.vmem [shape: f32[1,32], index: 2, kind: input, shape index: {}]
  %s3 = inlined_call_operand.vmem [shape: f32[32,5], index: 3, kind: input, shape index: {}]
  %s4 = inlined_call_operand.vmem [shape: f32[16,5], index: 4, kind: output, shape index: {}]
  %s5 = sld [smem:[#allocation0]]
  $region26: #{logits_d_forward.1} parent=0
    _
  %s7 = ssub.s32 1, %s5
  %s8 = scalar_select 0, %s7, %s5
  // Predicated region
  $region2: #{logits_d_forward.1} parent=0 // pred_check
    _
  $region3: #{logits_d_forward.1} parent=0 // pred_check_branch
    %10 = sbr.rel (0) target = $region5
  $region4: #{logits_d_forward.1} parent=0 // pred_region
    _
  $region5: #{logits_d_forward.1} parent=0 // pred_fallthru
    _
  // Predicated region
  $region6: #{logits_d_forward.1} parent=0 // pred_check
    _
  $region7: #{logits_d_forward.1} parent=0 // pred_check_branch
    %12 = sbr.rel (0) target = $region9
  $region8: #{logits_d_forward.1} parent=0 // pred_region
    _
  $region9: #{logits_d_forward.1} parent=0 // pred_fallthru
    _
  // Predicated region
  $region10: #{logits_d_forward.1} parent=0 // pred_check
    _
  $region11: #{logits_d_forward.1} parent=0 // pred_check_branch
    %14 = sbr.rel (0) target = $region13
  $region12: #{logits_d_forward.1} parent=0 // pred_region
    _
  $region13: #{logits_d_forward.1} parent=0 // pred_fallthru
    _
  // Predicated region
  $region14: #{logits_d_forward.1} parent=0 // pred_check
    _
  $region15: #{logits_d_forward.1} parent=0 // pred_check_branch
    %16 = sbr.rel (0) target = $region17
  $region16: #{logits_d_forward.1} parent=0 // pred_region
    _
  $region17: #{logits_d_forward.1} parent=0 // pred_fallthru
    _
  %v17 = vld [vmem:[%s0] sm:$0xff]
  %v18 = vld [vmem:[%s0 + $0x8] sm:$0xff]
  %v19 = vld [vmem:[%s1] sm:$0xff]
  %v20 = vld [vmem:[%s1 + $0x8] sm:$0xff]
  %v21 = vld [vmem:[%s1 + $0x10] sm:$0xff]
  %v22 = vld [vmem:[%s1 + $0x18] sm:$0xff]
  %v23 = vld [vmem:[%s2] sm:$0x1]
  %v25 = vlaneseq
  %v26 = vshrl.u32 %v25, 7
  %v27 = vsub.s32 0, %v26
  %v28 = vrot.slane %v23, %v27
  %vm30 = vcmask 261120
  %v32 = vsel %vm30, %v17, 0
  %v35 = vsel %vm30, %v18, 0
  %37 = vmatprep.subr.mxu0 0.0
  %38 = vmatpush1.msra.mxu0 %v19
  %39 = vmatprep.subr.mxu0 0.0
  %40 = vmatpush1.msra.mxu0 %v20
  %41 = vmatprep.subr.mxu0 0.0
  %42 = vmatpush1.msra.mxu0 %v21
  %43 = vmatprep.subr.mxu0 0.0
  %44 = vmatpush1.msra.mxu0 %v22
  %45 = vmatprep.subr.mxu0 0.0
  %46 = vmatpush1.msra.mxu0 0.0
  %47 = vmatprep.subr.mxu0 0.0
  %48 = vmatpush1.msra.mxu0 0.0
  %49 = vmatprep.subr.mxu0 0.0
  %50 = vmatpush1.msra.mxu0 0.0
  %51 = vmatprep.subr.mxu0 0.0
  %52 = vmatpush1.msra.mxu0 0.0
  %53 = vmatprep.subr.mxu0 0.0
  %54 = vmatpush1.msra.mxu0 0.0
  %55 = vmatprep.subr.mxu0 0.0
  %56 = vmatpush1.msra.mxu0 0.0
  %57 = vmatprep.subr.mxu0 0.0
  %58 = vmatpush1.msra.mxu0 0.0
  %59 = vmatprep.subr.mxu0 0.0
  %60 = vmatpush1.msra.mxu0 0.0
  %61 = vmatprep.subr.mxu0 0.0
  %62 = vmatpush1.msra.mxu0 0.0
  %63 = vmatprep.subr.mxu0 0.0
  %64 = vmatpush1.msra.mxu0 0.0
  %65 = vmatprep.subr.mxu0 0.0
  %66 = vmatpush1.msra.mxu0 0.0
  %67 = vmatprep.subr.mxu0 0.0
  %68 = vmatpush1.msra.mxu0 0.0
  %69 = vmatprep.subr.mxu0 0.0
  %70 = vmatpush1.msra.mxu0 0.0
  %71 = vmatprep.subr.mxu0 0.0
  %72 = vmatpush1.msra.mxu0 0.0
  %73 = vmatprep.subr.mxu0 0.0
  %74 = vmatpush1.msra.mxu0 0.0
  %75 = vmatprep.subr.mxu0 0.0
  %76 = vmatpush1.msra.mxu0 0.0
  %77 = vmatprep.subr.mxu0 0.0
  %78 = vmatpush1.msra.mxu0 0.0
  %79 = vmatprep.subr.mxu0 0.0
  %80 = vmatpush1.msra.mxu0 0.0
  %81 = vmatprep.subr.mxu0 0.0
  %82 = vmatpush1.msra.mxu0 0.0
  %83 = vmatprep.subr.mxu0 0.0
  %84 = vmatpush1.msra.mxu0 0.0
  %85 = vmatprep.subr.mxu0 0.0
  %86 = vmatpush1.msra.mxu0 0.0
  %87 = vmatprep.subr.mxu0 0.0
  %88 = vmatpush1.msra.mxu0 0.0
  %89 = vmatprep.subr.mxu0 0.0
  %90 = vmatpush1.msra.mxu0 0.0
  %91 = vmatprep.subr.mxu0 0.0
  %92 = vmatpush1.msra.mxu0 0.0
  %93 = vmatprep.subr.mxu0 0.0
  %94 = vmatpush1.msra.mxu0 0.0
  %95 = vmatprep.subr.mxu0 0.0
  %96 = vmatpush1.msra.mxu0 0.0
  %97 = vmatprep.subr.mxu0 0.0
  %98 = vmatpush1.msra.mxu0 0.0
  %99 = vmatprep.subr.mxu0 0.0
  %100 = vmatpush1.msra.mxu0 0.0
  %101 = vmatprep.mubr.f32.mxu0 0.0
  %102 = vmatmul.mubr.f32.gmra.mrb[0].mxu0 %v32
  %v103 = vpop.f32.mrb[0].mxu0
  %v104 = vadd.f32 %v28, %v103
  %v105 = vpop.f32.mrb[0].mxu0
  %106 = vmatprep.mubr.f32.mxu0 0.0
  %107 = vmatmul.mubr.f32.gmra.mrb[0].mxu0 %v35
  %v108 = vpop.f32.mrb[0].mxu0
  %v109 = vadd.f32 %v28, %v108
  %v110 = vpop.f32.mrb[0].mxu0
  %111 = vdwg.mxu0
  %v112 = vadd.f32 %v17, %v104
  %v113 = vadd.f32 %v18, %v109
  %v114 = vmax.f32 %v112, 0.0
  %v115 = vmax.f32 %v113, 0.0
  %v116 = vld [vmem:[%s3] sm:$0xff]
  %v117 = vld [vmem:[%s3 + $0x8] sm:$0xff]
  %v118 = vld [vmem:[%s3 + $0x10] sm:$0xff]
  %v119 = vld [vmem:[%s3 + $0x18] sm:$0xff]
  %v121 = vsel %vm30, %v114, 0
  %v124 = vsel %vm30, %v115, 0
  %126 = vmatprep.subr.mxu0 0.0
  %127 = vmatpush1.msra.mxu0 %v116
  %128 = vmatprep.subr.mxu0 0.0
  %129 = vmatpush1.msra.mxu0 %v117
  %130 = vmatprep.subr.mxu0 0.0
  %131 = vmatpush1.msra.mxu0 %v118
  %132 = vmatprep.subr.mxu0 0.0
  %133 = vmatpush1.msra.mxu0 %v119
  %134 = vmatprep.subr.mxu0 0.0
  %135 = vmatpush1.msra.mxu0 0.0
  %136 = vmatprep.subr.mxu0 0.0
  %137 = vmatpush1.msra.mxu0 0.0
  %138 = vmatprep.subr.mxu0 0.0
  %139 = vmatpush1.msra.mxu0 0.0
  %140 = vmatprep.subr.mxu0 0.0
  %141 = vmatpush1.msra.mxu0 0.0
  %142 = vmatprep.subr.mxu0 0.0
  %143 = vmatpush1.msra.mxu0 0.0
  %144 = vmatprep.subr.mxu0 0.0
  %145 = vmatpush1.msra.mxu0 0.0
  %146 = vmatprep.subr.mxu0 0.0
  %147 = vmatpush1.msra.mxu0 0.0
  %148 = vmatprep.subr.mxu0 0.0
  %149 = vmatpush1.msra.mxu0 0.0
  %150 = vmatprep.subr.mxu0 0.0
  %151 = vmatpush1.msra.mxu0 0.0
  %152 = vmatprep.subr.mxu0 0.0
  %153 = vmatpush1.msra.mxu0 0.0
  %154 = vmatprep.subr.mxu0 0.0
  %155 = vmatpush1.msra.mxu0 0.0
  %156 = vmatprep.subr.mxu0 0.0
  %157 = vmatpush1.msra.mxu0 0.0
  %158 = vmatprep.subr.mxu0 0.0
  %159 = vmatpush1.msra.mxu0 0.0
  %160 = vmatprep.subr.mxu0 0.0
  %161 = vmatpush1.msra.mxu0 0.0
  %162 = vmatprep.subr.mxu0 0.0
  %163 = vmatpush1.msra.mxu0 0.0
  %164 = vmatprep.subr.mxu0 0.0
  %165 = vmatpush1.msra.mxu0 0.0
  %166 = vmatprep.subr.mxu0 0.0
  %167 = vmatpush1.msra.mxu0 0.0
  %168 = vmatprep.subr.mxu0 0.0
  %169 = vmatpush1.msra.mxu0 0.0
  %170 = vmatprep.subr.mxu0 0.0
  %171 = vmatpush1.msra.mxu0 0.0
  %172 = vmatprep.subr.mxu0 0.0
  %173 = vmatpush1.msra.mxu0 0.0
  %174 = vmatprep.subr.mxu0 0.0
  %175 = vmatpush1.msra.mxu0 0.0
  %176 = vmatprep.subr.mxu0 0.0
  %177 = vmatpush1.msra.mxu0 0.0
  %178 = vmatprep.subr.mxu0 0.0
  %179 = vmatpush1.msra.mxu0 0.0
  %180 = vmatprep.subr.mxu0 0.0
  %181 = vmatpush1.msra.mxu0 0.0
  %182 = vmatprep.subr.mxu0 0.0
  %183 = vmatpush1.msra.mxu0 0.0
  %184 = vmatprep.subr.mxu0 0.0
  %185 = vmatpush1.msra.mxu0 0.0
  %186 = vmatprep.subr.mxu0 0.0
  %187 = vmatpush1.msra.mxu0 0.0
  %188 = vmatprep.subr.mxu0 0.0
  %189 = vmatpush1.msra.mxu0 0.0
  %190 = vmatprep.mubr.f32.mxu0 0.0
  %191 = vmatmul.mubr.f32.gmra.mrb[0].mxu0 %v121
  %v192 = vpop.f32.mrb[0].mxu0
  %v193 = vadd.f32 0.0, %v192
  %v194 = vpop.f32.mrb[0].mxu0
  %195 = vmatprep.mubr.f32.mxu0 0.0
  %196 = vmatmul.mubr.f32.gmra.mrb[0].mxu0 %v124
  %v197 = vpop.f32.mrb[0].mxu0
  %v198 = vadd.f32 0.0, %v197
  %v199 = vpop.f32.mrb[0].mxu0
  %200 = vdwg.mxu0
  %vm201 = vcmask 39936
  %202 = vst.msk [vmem:[%s4] sm:$0xff] %vm201, %v193
  %203 = vst.msk [vmem:[%s4 + $0x8] sm:$0xff] %vm201, %v198
  // Predicated region
  $region18: #{logits_d_forward.1} parent=0 // pred_check
    _
  $region19: #{logits_d_forward.1} parent=0 // pred_check_branch
    %205 = sbr.rel (0) target = $region21
  $region20: #{logits_d_forward.1} parent=0 // pred_region
    _
  $region21: #{logits_d_forward.1} parent=0 // pred_fallthru
    _
  // Predicated region
  $region22: #{logits_d_forward.1} parent=0 // pred_check
    _
  $region23: #{logits_d_forward.1} parent=0 // pred_check_branch
    %207 = sbr.rel (0) target = $region25
  $region24: #{logits_d_forward.1} parent=0 // pred_region
    _
  $region25: #{logits_d_forward.1} parent=0 // pred_fallthru
    _

</llo_original>
